<compile_context>
chip_gen: v5e
topology: v5e:2x2
jax: 0.10.0
libtpu: 0.0.40
codegen_flags: <defaults>
</compile_context>

<pallas_src>
import functools

import jax
import jax.numpy as jnp
from jax import lax
from jax.experimental import pallas as pl
from jax.experimental.pallas import tpu as pltpu

ALPHA = 0.25
GAMMA = 2.0

_OUT_SUB = 8     # sublane-aligned partial-sum block
_OUT_LANE = 128  # lane-aligned partial-sum block


def _cdiv(a, b):
    return -(-a // b)


def _focal_loss_kernel(logits_ref, targets_ref, out_ref, *, total_n):
    i = pl.program_id(0)

    logits = logits_ref[...].astype(jnp.float32)          # (TILE_N, C)
    tgt = targets_ref[...]                                 # (TILE_N, 1) int32
    tn, c = logits.shape

    # Row-validity mask for the ragged last tile (padded rows may hold
    # garbage).  No full-block masking of `logits` is needed: all row-wise
    # reductions keep garbage confined to its own row, and the final per-row
    # select below discards those rows entirely (TPU select does not
    # propagate NaN/Inf from the unselected branch).
    row_ids = i * tn + lax.broadcasted_iota(jnp.int32, (tn, 1), 0)
    valid = row_ids < total_n                               # (TILE_N, 1) bool

    # --- numerically stable cross entropy (reduction='none') ---
    m = jnp.max(logits, axis=-1, keepdims=True)             # (TILE_N, 1)
    shifted = logits - m                                     # (TILE_N, C)
    sum_exp = jnp.sum(jnp.exp(shifted), axis=-1, keepdims=True)

    # Target-class logit via a single fused masked reduce (no one-hot temp).
    class_ids = lax.broadcasted_iota(jnp.int32, (tn, c), 1)  # (TILE_N, C)
    tgt_shifted = jnp.sum(jnp.where(class_ids == tgt, shifted, 0.0),
                          axis=-1, keepdims=True)            # (TILE_N, 1)

    ce = jnp.log(sum_exp) - tgt_shifted                      # (TILE_N, 1)

    # p_t = exp(-ce) == exp(tgt_shifted) / sum_exp; use the approx EUP
    # reciprocal (separate slot, ~free) and avoid the log->exp dependency.
    p_t = jnp.exp(tgt_shifted) * pl.reciprocal(sum_exp, approx=True)

    # gamma == 2 -> explicit square (VPU mul), no pow/log path.
    w = 1.0 - p_t
    focal = ALPHA * (w * w) * ce
    focal = jnp.where(valid, focal, 0.0)                     # drop padded rows

    # Per-tile partial sum, broadcast over an aligned (1, 8, 128) block so
    # the store is an unmasked, layout-legal vreg write.
    tile_sum = jnp.sum(focal)
    out_ref[...] = jnp.broadcast_to(tile_sum, out_ref.shape).astype(jnp.float32)


def _vmem_limit_bytes():
    """Per-generation scoped-VMEM limit to request (with headroom)."""
    cap = 128 << 20  # v5e / v6e physical VMEM per TensorCore
    try:
        info = pltpu.get_tpu_info()
        cap = int(getattr(info, "vmem_capacity_bytes", cap))
    except Exception:
        pass
    # 3/4 of physical, capped at 96 MiB; leaves room for Mosaic's own scratch.
    return int(min(cap * 3 // 4, 96 << 20))


def _choose_tile_n(n, c, in_itemsize, vmem_budget_bytes, min_steps=4):
    """Batch-tile size from the in-kernel f32 working set, not HBM itemsize.

    Budget model per batch row:
      2 x double-buffered input block (native dtype)
      + ~4 live f32 (row, C) intermediates (shifted / exp / masked-gather / slack)
      + double-buffered int32 target.
    """
    align = {4: 8, 2: 16, 1: 32}.get(in_itemsize, 8)  # sublane packing
    if n <= align:
        return n                                       # full-extent block is legal
    per_row = c * (2 * in_itemsize + 4 * 4) + 2 * 4
    rows = vmem_budget_bytes // max(per_row, 1)
    # Keep at least `min_steps` grid steps: DMA/compute overlap + v7x dual-TC
    # sharding of the "parallel" axis (a 1-step grid idles one core).
    rows = min(rows, _cdiv(n, min_steps))
    rows = max(align, (rows // align) * align)
    return int(min(rows, n))


def focal_loss(logits, targets, *, alpha=ALPHA, gamma=GAMMA, tile_n=None):
    """logits: (N, C) float; targets: (N,) int class indices. Returns scalar f32."""
    assert alpha == ALPHA and gamma == GAMMA  # constants baked into the kernel
    n, c = logits.shape
    targets_2d = targets.astype(jnp.int32).reshape(n, 1)

    vmem_limit = _vmem_limit_bytes()
    if tile_n is None:
        tile_n = _choose_tile_n(n, c, jnp.dtype(logits.dtype).itemsize,
                                vmem_budget_bytes=vmem_limit // 2)
    num_tiles = _cdiv(n, tile_n)

    kernel = functools.partial(_focal_loss_kernel, total_n=n)

    partials = pl.pallas_call(
        kernel,
        out_shape=jax.ShapeDtypeStruct((num_tiles, _OUT_SUB, _OUT_LANE),
                                       jnp.float32),
        grid_spec=pltpu.PrefetchScalarGridSpec(
            num_scalar_prefetch=0,
            grid=(num_tiles,),
            in_specs=[
                pl.BlockSpec((tile_n, c), lambda i: (i, 0)),
                pl.BlockSpec((tile_n, 1), lambda i: (i, 0)),
            ],
            out_specs=pl.BlockSpec((1, _OUT_SUB, _OUT_LANE),
                                   lambda i: (i, 0, 0)),
        ),
        compiler_params=pltpu.CompilerParams(
            # independent per-tile partials -> shard across TCs on v7x
            dimension_semantics=("parallel",),
            vmem_limit_bytes=vmem_limit,
        ),
    )(logits, targets_2d)

    # Tiny final reduction (num_tiles scalars) stays in plain JAX; mean uses
    # the true N, not the padded row count.
    return jnp.sum(partials[:, 0, 0]) / jnp.float32(n)


def _focal_loss_ref(logits, targets, alpha=ALPHA, gamma=GAMMA):
    """Pure-JAX reference mirroring torch's F.cross_entropy + focal weighting."""
    logits = logits.astype(jnp.float32)
    logz = jax.nn.logsumexp(logits, axis=-1)
    tgt_logit = jnp.take_along_axis(
        logits, targets[:, None].astype(jnp.int32), axis=-1)[:, 0]
    ce = logz - tgt_logit
    p_t = jnp.exp(-ce)
    return jnp.mean(alpha * (1.0 - p_t) ** gamma * ce)


if __name__ == "__main__":
    key = jax.random.PRNGKey(0)
    k_logits, k_tgt = jax.random.split(key)

    # Small shapes; tile_n=16 gives a 3-step grid (16+16+8) so the pipelined
    # path AND the ragged-last-tile masking are both exercised; the second
    # call exercises the automatic VMEM-budget tile selection.
    N, C = 40, 32
    logits = jax.random.normal(k_logits, (N, C), dtype=jnp.float32)
    targets = jax.random.randint(k_tgt, (N,), 0, C, dtype=jnp.int32)

    out_tiled = focal_loss(logits, targets, tile_n=16)
    out_auto = focal_loss(logits, targets)
    jax.block_until_ready((out_tiled, out_auto))

    ref = _focal_loss_ref(logits, targets)
    # rtol loosened vs exact-math because p_t uses the approx EUP reciprocal.
    assert jnp.allclose(out_tiled, ref, rtol=1e-3, atol=1e-6), (out_tiled, ref)
    assert jnp.allclose(out_auto, ref, rtol=1e-3, atol=1e-6), (out_auto, ref)

    print("KERNEL_OK")
</pallas_src>

<mosaic_0001>
module attributes {stable_mosaic.version = 11 : i64} {
  func.func @_focal_loss_kernel(%arg0: i32, %arg1: memref<16x32xf32, #tpu.memory_space<vmem>>, %arg2: memref<16x1xi32, #tpu.memory_space<vmem>>, %arg3: memref<1x8x128xf32, #tpu.memory_space<vmem>>) attributes {dimension_semantics = [#tpu.dimension_semantics<parallel>], iteration_bounds = array<i64: 3>, scalar_prefetch = 0 : i64, scratch_operands = 0 : i64, tpu.core_type = #tpu.core_type<tc>, window_params = [{transform_indices = @transform_0, window_bounds = array<i64: 16, 32>}, {transform_indices = @transform_1, window_bounds = array<i64: 16, 1>}, {transform_indices = @transform_2, window_bounds = array<i64: 1, 8, 128>}]} {
    %c0 = arith.constant 0 : index
    %c0_0 = arith.constant 0 : index
    %0 = vector.load %arg1[%c0, %c0_0] : memref<16x32xf32, #tpu.memory_space<vmem>>, vector<16x32xf32>
    %c0_1 = arith.constant 0 : index
    %c0_2 = arith.constant 0 : index
    %1 = vector.load %arg2[%c0_1, %c0_2] : memref<16x1xi32, #tpu.memory_space<vmem>>, vector<16x1xi32>
    %c16_i32 = arith.constant 16 : i32
    %2 = arith.muli %arg0, %c16_i32 : i32
    %3 = tpu.iota {dimensions = array<i32: 0>} : vector<16x1xi32>
    %4 = vector.broadcast %2 : i32 to vector<16x1xi32>
    %5 = arith.addi %4, %3 : vector<16x1xi32>
    %c40_i32 = arith.constant 40 : i32
    %6 = vector.broadcast %c40_i32 : i32 to vector<16x1xi32>
    %7 = arith.cmpi slt, %5, %6 : vector<16x1xi32>
    %cst = arith.constant dense<0xFF800000> : vector<16xf32>
    %8 = vector.multi_reduction <maximumf>, %0, %cst [1] : vector<16x32xf32> to vector<16xf32>
    %9 = vector.shape_cast %8 : vector<16xf32> to vector<16x1xf32>
    %10 = vector.broadcast %9 : vector<16x1xf32> to vector<16x32xf32>
    %11 = arith.subf %0, %10 : vector<16x32xf32>
    %12 = math.exp %11 : vector<16x32xf32>
    %cst_3 = arith.constant dense<0.000000e+00> : vector<16xf32>
    %13 = vector.multi_reduction <add>, %12, %cst_3 [1] : vector<16x32xf32> to vector<16xf32>
    %14 = vector.shape_cast %13 : vector<16xf32> to vector<16x1xf32>
    %15 = tpu.iota {dimensions = array<i32: 1>} : vector<16x32xi32>
    %16 = vector.broadcast %1 : vector<16x1xi32> to vector<16x32xi32>
    %17 = arith.cmpi eq, %15, %16 : vector<16x32xi32>
    %cst_4 = arith.constant 0.000000e+00 : f32
    %18 = vector.broadcast %cst_4 : f32 to vector<16x32xf32>
    %19 = arith.select %17, %11, %18 : vector<16x32xi1>, vector<16x32xf32>
    %cst_5 = arith.constant dense<0.000000e+00> : vector<16xf32>
    %20 = vector.multi_reduction <add>, %19, %cst_5 [1] : vector<16x32xf32> to vector<16xf32>
    %21 = vector.shape_cast %20 : vector<16xf32> to vector<16x1xf32>
    %22 = math.log %14 : vector<16x1xf32>
    %23 = arith.subf %22, %21 : vector<16x1xf32>
    %24 = math.exp %21 : vector<16x1xf32>
    %25 = tpu.reciprocal %14 {approx = true} : vector<16x1xf32> -> vector<16x1xf32>
    %26 = arith.mulf %24, %25 : vector<16x1xf32>
    %cst_6 = arith.constant 1.000000e+00 : f32
    %27 = vector.broadcast %cst_6 : f32 to vector<16x1xf32>
    %28 = arith.subf %27, %26 : vector<16x1xf32>
    %29 = arith.mulf %28, %28 : vector<16x1xf32>
    %cst_7 = arith.constant 2.500000e-01 : f32
    %30 = vector.broadcast %cst_7 : f32 to vector<16x1xf32>
    %31 = arith.mulf %30, %29 : vector<16x1xf32>
    %32 = arith.mulf %31, %23 : vector<16x1xf32>
    %cst_8 = arith.constant 0.000000e+00 : f32
    %33 = vector.broadcast %cst_8 : f32 to vector<16x1xf32>
    %34 = arith.select %7, %32, %33 : vector<16x1xi1>, vector<16x1xf32>
    %35 = vector.shape_cast %34 : vector<16x1xf32> to vector<1x16x1xf32>
    %cst_9 = arith.constant dense<0.000000e+00> : vector<1xf32>
    %36 = vector.multi_reduction <add>, %35, %cst_9 [1, 2] : vector<1x16x1xf32> to vector<1xf32>
    %37 = vector.shape_cast %36 : vector<1xf32> to vector<1x1x1xf32>
    %38 = vector.extract %37[0, 0, 0] : f32 from vector<1x1x1xf32>
    %39 = vector.broadcast %38 : f32 to vector<1x8x128xf32>
    %c0_10 = arith.constant 0 : index
    %c0_11 = arith.constant 0 : index
    %c0_12 = arith.constant 0 : index
    %40 = vector.load %arg3[%c0_10, %c0_11, %c0_12] : memref<1x8x128xf32, #tpu.memory_space<vmem>>, vector<1x8x128xf32>
    tpu.vector_store %arg3[%c0_10, %c0_11, %c0_12], %39 {strides = array<i32>} : memref<1x8x128xf32, #tpu.memory_space<vmem>>, vector<1x8x128xf32>,
    return
  }
  func.func @transform_0(%arg0: i32) -> (i32, i32) {
    %c0_i32 = arith.constant 0 : i32
    %c0_i32_0 = arith.constant 0 : i32
    return %arg0, %c0_i32 : i32, i32
  }
  func.func @transform_1(%arg0: i32) -> (i32, i32) {
    %c0_i32 = arith.constant 0 : i32
    %c0_i32_0 = arith.constant 0 : i32
    return %arg0, %c0_i32 : i32, i32
  }
  func.func @transform_2(%arg0: i32) -> (i32, i32, i32) {
    %c0_i32 = arith.constant 0 : i32
    %c0_i32_0 = arith.constant 0 : i32
    %c0_i32_1 = arith.constant 0 : i32
    return %arg0, %c0_i32, %c0_i32_0 : i32, i32, i32
  }
}

</mosaic_0001>

<llo_original>
// kernel: tpu_custom_call.1
$region0: #{tpu_custom_call.1}
  #allocation0 [shape = 'u32[]', space=smem, size = 0x4, offset = 0x4, fixed_abs, tag = 'smem constant byte address 0x4 - core index']
  #allocation1 [shape = 'u32[72,128]{1,0:T(1,128)}', space=vmem, size = 0x9000, scoped, tag = 'internal scratch']
  %s0 = inlined_call_operand.vmem [shape: f32[40,32], index: 0, kind: input, shape index: {}]
  %s1 = inlined_call_operand.vmem [shape: s32[40,1], index: 1, kind: input, shape index: {}]
  %s2 = inlined_call_operand.hbm [shape: f32[3,8,128], index: 2, kind: output, shape index: {}]
  %s3 = sld [smem:[#allocation0]]
  $region41: #{tpu_custom_call.1} parent=0
    _
  %s5 = ssub.s32 1, %s3
  %s6 = scalar_select 0, %s5, %s3
  $region1: #{tpu_custom_call.1} parent=0
    #allocation2 [shape = 'u8[8192]{0}', space=vmem, size = 0x2000, scoped, tag = 'output window, operand 0']
    #allocation3 [shape = 's32[2]{0}', space=sflag, size = 0x8, scoped, tag = 'scoped memory for tpu_custom_call.1']
    %7 = vsyncpa [#allocation3], 0
    %s8 = scalar_lea.sflag [#allocation3], 1
    %9 = vsyncpa %s8, 0
    loop: start=0, step=1, limit=5
    $region2: #{tpu_custom_call.1} parent=1 // loop_pre_header
      _
    $region3: #{tpu_custom_call.1} parent=1 // loop_header
      %s11 = sphi 0, %s15
      %p12 = scmp.ge.s32.totalorder %s11, 5
      %s21 = sphi 0, %s23
      %s24 = sphi 0, %s21
      %s25 = sphi 0, %s24
      %s41 = sphi 0, %s25
      %s47 = sphi 0, %s49
      %s50 = sphi 0, %s47
      %s51 = sphi 0, %s50
      %s67 = sphi 0, %s51
      %s73 = sphi 0, %s75
      %s76 = sphi 0, %s73
      %s77 = sphi 0, %s76
      %s93 = sphi 0, %s77
    $region4: #{tpu_custom_call.1} parent=1 // loop_header_branch
      %14 = sbr.rel (%p12) target = $region8
    $region5: #{tpu_custom_call.1} parent=1 // loop_body
      %s16 = ssub.s32 %s11, 1
      %s17 = ssub.s32 %s11, 2
      %s18 = sadd.s32 %s11, 1
      %s19 = ssub.s32 %s11, %s18
      %p20 = scmp.eq.s32.totalorder %s19, 0
      %s22 = sadd.s32 %s21, 1
      %s23 = scalar_select %p20, %s21, %s22
      %p26 = pneg %p20
      %p27 = scmp.eq.s32.totalorder %s11, 2
      %p28 = por %p26, %p27
      %p29 = scmp.ne.s32.totalorder %s21, %s24
      %p30 = scmp.eq.s32.totalorder %s11, 0
      %p31 = por %p29, %p30
      %p32 = scmp.ne.s32.totalorder %s21, %s24
      %p33 = scmp.eq.s32.totalorder %s16, 2
      %p34 = por %p32, %p33
      %p35 = scmp.ne.s32.totalorder %s24, %s25
      %p36 = scmp.eq.s32.totalorder %s16, 0
      %p37 = por %p35, %p36
      %p38 = scmp.ne.s32.totalorder %s24, %s25
      %p39 = scmp.eq.s32.totalorder %s17, 2
      %p40 = por %p38, %p39
      %p42 = scmp.ne.s32.totalorder %s25, %s41
      %p43 = scmp.eq.s32.totalorder %s17, 0
      %p44 = por %p42, %p43
      %s45 = ssub.s32 %s11, %s18
      %p46 = scmp.eq.s32.totalorder %s45, 0
      %s48 = sadd.s32 %s47, 1
      %s49 = scalar_select %p46, %s47, %s48
      %p52 = pneg %p46
      %p53 = scmp.eq.s32.totalorder %s11, 2
      %p54 = por %p52, %p53
      %p55 = scmp.ne.s32.totalorder %s47, %s50
      %p56 = scmp.eq.s32.totalorder %s11, 0
      %p57 = por %p55, %p56
      %p58 = scmp.ne.s32.totalorder %s47, %s50
      %p59 = scmp.eq.s32.totalorder %s16, 2
      %p60 = por %p58, %p59
      %p61 = scmp.ne.s32.totalorder %s50, %s51
      %p62 = scmp.eq.s32.totalorder %s16, 0
      %p63 = por %p61, %p62
      %p64 = scmp.ne.s32.totalorder %s50, %s51
      %p65 = scmp.eq.s32.totalorder %s17, 2
      %p66 = por %p64, %p65
      %p68 = scmp.ne.s32.totalorder %s51, %s67
      %p69 = scmp.eq.s32.totalorder %s17, 0
      %p70 = por %p68, %p69
      %s71 = ssub.s32 %s11, %s18
      %p72 = scmp.eq.s32.totalorder %s71, 0
      %s74 = sadd.s32 %s73, 1
      %s75 = scalar_select %p72, %s73, %s74
      %p78 = pneg %p72
      %p79 = scmp.eq.s32.totalorder %s11, 2
      %p80 = por %p78, %p79
      %p81 = scmp.ne.s32.totalorder %s73, %s76
      %p82 = scmp.eq.s32.totalorder %s11, 0
      %p83 = por %p81, %p82
      %p84 = scmp.ne.s32.totalorder %s73, %s76
      %p85 = scmp.eq.s32.totalorder %s16, 2
      %p86 = por %p84, %p85
      %p87 = scmp.ne.s32.totalorder %s76, %s77
      %p88 = scmp.eq.s32.totalorder %s16, 0
      %p89 = por %p87, %p88
      %p90 = scmp.ne.s32.totalorder %s76, %s77
      %p91 = scmp.eq.s32.totalorder %s17, 2
      %p92 = por %p90, %p91
      %p94 = scmp.ne.s32.totalorder %s77, %s93
      %p95 = scmp.eq.s32.totalorder %s17, 0
      %p96 = por %p94, %p95
      %p97 = scmp.le.s32.totalorder 1, %s11
      %p98 = scmp.lt.s32.totalorder %s11, 4
      %p99 = pnand %p97, %p98
      %p100 = pneg %p99
      // Predicated region
      $region9: #{tpu_custom_call.1} parent=5 // pred_check
        _
      $region10: #{tpu_custom_call.1} parent=5 // pred_check_branch
        %102 = sbr.rel (%p99) target = $region12
      $region11: #{tpu_custom_call.1} parent=5 // pred_region
        %s103 = ssub.s32 %s11, 1
      $region12: #{tpu_custom_call.1} parent=5 // pred_fallthru
        _
      %p104 = scmp.lt.s32.totalorder %s11, 3
      // Predicated region
      $region13: #{tpu_custom_call.1} parent=5 // pred_check
        %p105 = pneg %p104
      $region14: #{tpu_custom_call.1} parent=5 // pred_check_branch
        %107 = sbr.rel (%p105) target = $region16
      $region15: #{tpu_custom_call.1} parent=5 // pred_region
        // Predicated region
        $region17: #{tpu_custom_call.1} parent=15 // pred_check
          %p108 = pneg %p31
        $region18: #{tpu_custom_call.1} parent=15 // pred_check_branch
          %110 = sbr.rel (%p108) target = $region20
        $region19: #{tpu_custom_call.1} parent=15 // pred_region
          %s111 = smul.u32 2, %s11
          %s112 = ssub.s32 5, %s111
          %p113 = scmp.lt.s32.totalorder %s112, 2
          %s114 = scalar_select %p113, %s112, 2
          %s115 = smul.u32 8, %s114
          %p116 = scmp.lt.s32.totalorder %s111, 4
          %s117 = scalar_select %p116, %s111, 4
          %s118 = smul.addr %s117, 8
          %s119 = scalar_lea.vmem %s0, %s118
          %s120 = smul.u32 2, %s11
          %s121 = ssub.s32 5, %s120
          %p122 = scmp.lt.s32.totalorder %s121, 2
          %s123 = scalar_select %p122, %s121, 2
          %s124 = smul.u32 8, %s123
        $region20: #{tpu_custom_call.1} parent=15 // pred_fallthru
          _
        // Predicated region
        $region21: #{tpu_custom_call.1} parent=15 // pred_check
          %p125 = pneg %p57
        $region22: #{tpu_custom_call.1} parent=15 // pred_check_branch
          %127 = sbr.rel (%p125) target = $region24
        $region23: #{tpu_custom_call.1} parent=15 // pred_region
          %s128 = smul.u32 2, %s11
          %s129 = ssub.s32 5, %s128
          %p130 = scmp.lt.s32.totalorder %s129, 2
          %s131 = scalar_select %p130, %s129, 2
          %s132 = smul.u32 8, %s131
          %p133 = scmp.lt.s32.totalorder %s128, 4
          %s134 = scalar_select %p133, %s128, 4
          %s135 = smul.addr %s134, 8
          %s136 = scalar_lea.vmem %s1, %s135
          %s137 = smul.u32 2, %s11
          %s138 = ssub.s32 5, %s137
          %p139 = scmp.lt.s32.totalorder %s138, 2
          %s140 = scalar_select %p139, %s138, 2
          %s141 = smul.u32 8, %s140
        $region24: #{tpu_custom_call.1} parent=15 // pred_fallthru
          _
      $region16: #{tpu_custom_call.1} parent=5 // pred_fallthru
        _
      %p142 = scmp.le.s32.totalorder 1, %s11
      %p143 = scmp.lt.s32.totalorder %s11, 4
      %p144 = pnand %p142, %p143
      %p145 = pneg %p144
      // Predicated region
      $region25: #{tpu_custom_call.1} parent=5 // pred_check
        _
      $region26: #{tpu_custom_call.1} parent=5 // pred_check_branch
        %147 = sbr.rel (%p144) target = $region28
      $region27: #{tpu_custom_call.1} parent=5 // pred_region
        %s148 = ssub.s32 %s11, 1
        %s149 = smul.u32 2, %s16
        %s150 = ssub.s32 5, %s149
        %p151 = scmp.lt.s32.totalorder %s150, 2
        %s152 = scalar_select %p151, %s150, 2
        %s153 = smul.u32 8, %s152
        %p154 = scmp.lt.s32.totalorder %s149, 4
        %s155 = scalar_select %p154, %s149, 4
        %s156 = smul.addr %s155, 8
        %s157 = scalar_lea.vmem %s0, %s156
        %p158 = pneg %p37
        %p159 = pneg %p34
        %s160 = smul.u32 2, %s16
        %s161 = ssub.s32 5, %s160
        %p162 = scmp.lt.s32.totalorder %s161, 2
        %s163 = scalar_select %p162, %s161, 2
        %s164 = smul.u32 8, %s163
        %p165 = scmp.lt.s32.totalorder %s160, 4
        %s166 = scalar_select %p165, %s160, 4
        %s167 = smul.addr %s166, 8
        %s168 = scalar_lea.vmem %s1, %s167
        %p169 = pneg %p63
        %p170 = pneg %p60
        %p171 = pneg %p89
        %p172 = pneg %p86
        %s173 = sand.u32 %s76, 1
        %s174 = scalar_lea.sflag [#allocation3], %s173
        %s175 = sand.u32 %s76, 1
        %s176 = smul.addr %s175, 8
        %s177 = scalar_lea.vmem [#allocation2], %s176
        %s178 = smul.u32 2, %s16
        %s179 = ssub.s32 5, %s178
        %p180 = scmp.lt.s32.totalorder %s179, 2
        %s181 = scalar_select %p180, %s179, 2
        %s182 = smul.u32 8, %s181
        %p183 = scmp.lt.s32.totalorder %s178, 4
        %s184 = scalar_select %p183, %s178, 4
        %s185 = smul.addr %s184, 8
        %s186 = scalar_lea.vmem %s0, %s185
        %s187 = smul.u32 2, %s16
        %s188 = ssub.s32 5, %s187
        %p189 = scmp.lt.s32.totalorder %s188, 2
        %s190 = scalar_select %p189, %s188, 2
        %s191 = smul.u32 8, %s190
        %s192 = smul.u32 2, %s16
        %s193 = ssub.s32 5, %s192
        %p194 = scmp.lt.s32.totalorder %s193, 2
        %s195 = scalar_select %p194, %s193, 2
        %s196 = smul.u32 8, %s195
        %p197 = scmp.lt.s32.totalorder %s192, 4
        %s198 = scalar_select %p197, %s192, 4
        %s199 = smul.addr %s198, 8
        %s200 = scalar_lea.vmem %s1, %s199
        %s201 = smul.u32 2, %s16
        %s202 = ssub.s32 5, %s201
        %p203 = scmp.lt.s32.totalorder %s202, 2
        %s204 = scalar_select %p203, %s202, 2
        %s205 = smul.u32 8, %s204
        %v206 = vld [vmem:[%s186] sm:$0xff]
        %v207 = vld [vmem:[%s186 + $0x8] sm:$0xff]
        %v208 = vld [vmem:[%s200] sm:$0xff]
        %v209 = vld [vmem:[%s200 + $0x8] sm:$0xff]
        %s210 = smul.u32 %s16, 16
        %v211 = vlaneseq
        %v212 = vshrl.u32 %v211, 7
        %v213 = vadd.s32 %v212, 8
        %v214 = vstv %s210
        %v215 = vadd.s32 %v214, %v212
        %v216 = vadd.s32 %v214, %v213
        %vm217 = vcmp.lt.s32.totalorder %v215, 40
        %vm218 = vcmp.lt.s32.totalorder %v216, 40
        %vm219 = vcmask 261120
        %v220 = vsel %vm219, %v206, -inf
        %221 = vmax.xlane.f32.xlu0 %v220
        %v222 = vpop.xlane.xlu0 %221
        %v223 = vsel %vm219, %v207, -inf
        %224 = vmax.xlane.f32.xlu0 %v223
        %v225 = vpop.xlane.xlu0 %224
        %v226 = vsub.f32 %v206, %v222
        %v227 = vsub.f32 %v207, %v225
        %v228 = vmul.f32 %v226, 1.442695
        %v229 = vpow.pop %v228
        %v230 = vmul.f32 %v227, 1.442695
        %v231 = vpow.pop %v230
        %v232 = vsel %vm219, %v229, 0.0
        %233 = vadd.xlane.f32.xlu0 %v232
        %v234 = vpop.xlane.xlu0 %233
        %v235 = vsel %vm219, %v231, 0.0
        %236 = vadd.xlane.f32.xlu0 %v235
        %v237 = vpop.xlane.xlu0 %236
        %v238 = vlaneseq
        %v239 = vand.u32 %v238, 127
        %240 = vset.pattern.permute.xlu0 0
        %241 = vperm.xlu0 %240, %v208
        %v242 = vpop.permute.xlu0 %241
        %243 = vset.pattern.permute.xlu0 0
        %244 = vperm.xlu0 %243, %v209
        %v245 = vpop.permute.xlu0 %244
        %vm246 = vcmp.eq.s32.totalorder %v239, %v242
        %vm247 = vcmp.eq.s32.totalorder %v239, %v245
        %v248 = vsel %vm246, %v226, 0.0
        %v249 = vsel %vm247, %v227, 0.0
        %v250 = vsel %vm219, %v248, 0.0
        %251 = vadd.xlane.f32.xlu0 %v250
        %v252 = vpop.xlane.xlu0 %251
        %v253 = vsel %vm219, %v249, 0.0
        %254 = vadd.xlane.f32.xlu0 %v253
        %v255 = vpop.xlane.xlu0 %254
        %v256 = vlog2.pop %v234
        %v257 = vmul.f32 %v256, 0.6931472
        %v258 = vlog2.pop %v237
        %v259 = vmul.f32 %v258, 0.6931472
        %v260 = vsub.f32 %v257, %v252
        %v261 = vsub.f32 %v259, %v255
        %v262 = vmul.f32 %v252, 1.442695
        %v263 = vpow.pop %v262
        %v264 = vmul.f32 %v255, 1.442695
        %v265 = vpow.pop %v264
        %v266 = vrcp.pop %v234
        %v267 = vrcp.pop %v237
        %v268 = vmul.f32 %v263, %v266
        %v269 = vmul.f32 %v265, %v267
        %v270 = vsub.f32 1.0, %v268
        %v271 = vsub.f32 1.0, %v269
        %v272 = vmul.f32 %v270, %v270
        %v273 = vmul.f32 %v271, %v271
        %v274 = vmul.f32 %v272, 0.25
        %v275 = vmul.f32 %v273, 0.25
        %v276 = vmul.f32 %v274, %v260
        %v277 = vmul.f32 %v275, %v261
        %v278 = vsel %vm217, %v276, 0.0
        %v279 = vsel %vm218, %v277, 0.0
        %vm280 = vcmask 7168
        %v281 = vsel %vm280, %v278, 0.0
        %v282 = vsel %vm280, %v279, 0.0
        %v283 = vadd.f32 %v281, %v282
        %284 = vadd.xlane.f32.xlu0 %v283
        %v285 = vpop.xlane.xlu0 %284
        %v286 = vrot.slane %v285, 4
        %v287 = vadd.f32 %v285, %v286
        %v288 = vrot.slane %v287, 2
        %v289 = vadd.f32 %v287, %v288
        %v290 = vrot.slane %v289, 1
        %v291 = vadd.f32 %v289, %v290
        %s292 = vtos %v291
        %v293 = vstv %s292
        %294 = vst [vmem:[%s177] sm:$0xff] %v293
        %s295 = sand.u32 %s76, 1
        %s296 = scalar_lea.sflag [#allocation3], %s295
        %s297 = sand.u32 %s76, 1
        %s298 = smul.addr %s297, 8
        %s299 = scalar_lea.vmem [#allocation2], %s298
        // Predicated region
        $region29: #{tpu_custom_call.1} parent=27 // pred_check
          %p300 = pneg %p86
        $region30: #{tpu_custom_call.1} parent=27 // pred_check_branch
          %302 = sbr.rel (%p300) target = $region32
        $region31: #{tpu_custom_call.1} parent=27 // pred_region
          %304 = vsyncadd %s296, 0
          %s305 = smul.addr %s16, 8
          %s306 = scalar_lea.hbm %s2, %s305
          %s308 = sshll.u32 %s299, 4
          %s309 = int_to_ptr.vmem [resolvable:$true] %s308
          %s310 = sshll.u32 %s306, 4
          %s311 = int_to_ptr.hbm [resolvable:$true] %s310
          %313 = dma.vmem_to_hbm [thread:$0]  %s309, 128, %s311, %s296
        $region32: #{tpu_custom_call.1} parent=27 // pred_fallthru
          _
      $region28: #{tpu_custom_call.1} parent=5 // pred_fallthru
        _
      %p314 = scmp.le.s32.totalorder 2, %s11
      // Predicated region
      $region33: #{tpu_custom_call.1} parent=5 // pred_check
        %p315 = pneg %p314
      $region34: #{tpu_custom_call.1} parent=5 // pred_check_branch
        %317 = sbr.rel (%p315) target = $region36
      $region35: #{tpu_custom_call.1} parent=5 // pred_region
        %s318 = ssub.s32 %s11, 2
        // Predicated region
        $region37: #{tpu_custom_call.1} parent=35 // pred_check
          %p319 = pneg %p92
        $region38: #{tpu_custom_call.1} parent=35 // pred_check_branch
          %321 = sbr.rel (%p319) target = $region40
        $region39: #{tpu_custom_call.1} parent=35 // pred_region
          %s322 = sand.u32 %s77, 1
          %s323 = scalar_lea.sflag [#allocation3], %s322
          %s324 = sand.u32 %s77, 1
          %s325 = smul.addr %s324, 8
          %s326 = scalar_lea.vmem [#allocation2], %s325
          %328 = dma.done %s323, 128
        $region40: #{tpu_custom_call.1} parent=35 // pred_fallthru
          _
      $region36: #{tpu_custom_call.1} parent=5 // pred_fallthru
        _
    $region6: #{tpu_custom_call.1} parent=1 // loop_footer
      %s15 = sadd.s32 1, %s11
    $region7: #{tpu_custom_call.1} parent=1 // loop_footer_branch
      %10 = sbr.rel target = $region3
    $region8: #{tpu_custom_call.1} parent=1 // loop_exit
      _
    %329 = vsyncpa [#allocation3], 1
    %s330 = scalar_lea.sflag [#allocation3], 1
    %331 = vsyncpa %s330, 1

</llo_original>
